<compile_context>
chip_gen: v7x
topology: tpu7x:2x2x1
jax: 0.10.0
libtpu: 0.0.40
codegen_flags: <defaults>
</compile_context>

<pallas_src>
import functools

import jax
import jax.numpy as jnp
from jax.experimental import pallas as pl
from jax.experimental.pallas import tpu as pltpu


def _round_up(n: int, m: int) -> int:
    return ((n + m - 1) // m) * m


# --------------------------------------------------------------------------
# Kernel
# --------------------------------------------------------------------------
def autoencoder_kernel(x_ref, w1_ref, b1_ref, w2_ref, b2_ref, o_ref):
    def sigmoid_f32(z):
        # Mathematically identical to logistic sigmoid; tanh runs on the EUP
        # (separate bundle slot), avoiding a VPU divide.
        return 0.5 * (jnp.tanh(0.5 * z) + 1.0)

    # In-kernel bf16 cast of the f32 activation tile (MXU-native operands,
    # f32 accumulation via preferred_element_type).
    x_mm = x_ref[...].astype(w1_ref.dtype)

    # encoded = sigmoid(x @ W1 + b1)
    z1 = jnp.dot(x_mm, w1_ref[...], preferred_element_type=jnp.float32)
    z1 = z1 + b1_ref[...]                      # (1, K) broadcasts over batch rows
    enc = sigmoid_f32(z1)

    # decoded = sigmoid(encoded @ W2 + b2)
    enc = enc.astype(w2_ref.dtype)             # back to bf16 for the MXU
    z2 = jnp.dot(enc, w2_ref[...], preferred_element_type=jnp.float32)
    z2 = z2 + b2_ref[...]
    o_ref[...] = sigmoid_f32(z2).astype(o_ref.dtype)


# --------------------------------------------------------------------------
# One-time parameter preparation (hoisted out of the per-call forward)
# --------------------------------------------------------------------------
def prepare_autoencoder_params(w1, b1, w2, b2, *, use_bf16=True):
    """Pad feature dims to multiples of 128 and cast weights for the MXU.

    w1: (nq, k)  = g.weight.T     b1: (k,)  = g.bias
    w2: (k, nq)  = h.weight.T     b2: (nq,) = h.bias
    """
    nq, k = w1.shape
    nq_p = _round_up(nq, 128)
    k_p = _round_up(k, 128)
    mm_dtype = jnp.bfloat16 if use_bf16 else jnp.float32

    # Zero-padding of W1/W2 (and of x's feature dim in the forward) keeps the
    # padded latent columns from contributing to the decoded output.
    w1p = jnp.pad(w1, ((0, nq_p - nq), (0, k_p - k))).astype(mm_dtype)
    w2p = jnp.pad(w2, ((0, k_p - k), (0, nq_p - nq))).astype(mm_dtype)
    b1p = jnp.pad(jnp.reshape(b1, (1, k)).astype(jnp.float32),
                  ((0, 0), (0, k_p - k)))
    b2p = jnp.pad(jnp.reshape(b2, (1, nq)).astype(jnp.float32),
                  ((0, 0), (0, nq_p - nq)))
    return {"w1": w1p, "b1": b1p, "w2": w2p, "b2": b2p,
            "nq": nq, "k": k, "nq_p": nq_p, "k_p": k_p}


def _auto_tile_b(batch: int) -> int:
    """Pick a batch tile: one tile for small batches, otherwise an even number
    of tiles (v7x megacore) capped at 512 rows, multiple of 16."""
    b16 = _round_up(batch, 16)
    if b16 <= 256:
        return b16
    return min(512, _round_up(pl.cdiv(b16, 2), 256))


# --------------------------------------------------------------------------
# Forward pass
# --------------------------------------------------------------------------
def autoencoder_forward(x, params, *, tile_b=None, out_dtype=None):
    """Fused AutoEncoder forward. x: (B, nq) float32; params from
    prepare_autoencoder_params."""
    B, nq = x.shape
    assert nq == params["nq"], (nq, params["nq"])
    nq_p, k_p = params["nq_p"], params["k_p"]
    out_dtype = x.dtype if out_dtype is None else out_dtype

    if tile_b is None:
        tile_b = _auto_tile_b(B)
    tile_b = max(16, _round_up(min(tile_b, _round_up(B, 16)), 16))
    num_tiles = pl.cdiv(B, tile_b)
    B_p = num_tiles * tile_b

    # x stays f32 in HBM; only batch/feature zero-padding here. The bf16 cast
    # happens inside the kernel.
    xp = jnp.pad(x, ((0, B_p - B), (0, nq_p - nq)))

    out = pl.pallas_call(
        autoencoder_kernel,
        out_shape=jax.ShapeDtypeStruct((B_p, nq_p), out_dtype),
        grid_spec=pltpu.PrefetchScalarGridSpec(
            num_scalar_prefetch=0,
            grid=(num_tiles,),
            in_specs=[
                pl.BlockSpec((tile_b, nq_p), lambda i: (i, 0)),  # x tile (f32)
                pl.BlockSpec((nq_p, k_p), lambda i: (0, 0)),     # W1 (resident)
                pl.BlockSpec((1, k_p), lambda i: (0, 0)),        # b1 (resident)
                pl.BlockSpec((k_p, nq_p), lambda i: (0, 0)),     # W2 (resident)
                pl.BlockSpec((1, nq_p), lambda i: (0, 0)),       # b2 (resident)
            ],
            out_specs=pl.BlockSpec((tile_b, nq_p), lambda i: (i, 0)),
        ),
        compiler_params=pltpu.CompilerParams(
            dimension_semantics=("parallel",),   # batch axis -> megacore split
            vmem_limit_bytes=32 * 1024 * 1024,   # covers tile_b up to 1024 on all gens
        ),
    )(xp, params["w1"], params["b1"], params["w2"], params["b2"])

    # strip batch / feature padding
    return out[:B, :nq]


if __name__ == "__main__":
    # Shapes consistent with the module: num_question=256, latent k=128,
    # batch=512 users -> 2 batch tiles of 256 (even count keeps both v7x
    # TensorCores busy; single extra ~0.35us step on v5e/v6e).
    B, NQ, K = 512, 256, 128

    key = jax.random.PRNGKey(0)
    kx, kw1, kb1, kw2, kb2 = jax.random.split(key, 5)

    x = jax.random.normal(kx, (B, NQ), dtype=jnp.float32)
    lim1 = 1.0 / jnp.sqrt(NQ)
    lim2 = 1.0 / jnp.sqrt(K)
    w1 = jax.random.uniform(kw1, (NQ, K), jnp.float32, -lim1, lim1)   # g.weight.T
    b1 = jax.random.uniform(kb1, (K,), jnp.float32, -lim1, lim1)      # g.bias
    w2 = jax.random.uniform(kw2, (K, NQ), jnp.float32, -lim2, lim2)   # h.weight.T
    b2 = jax.random.uniform(kb2, (NQ,), jnp.float32, -lim2, lim2)     # h.bias

    # One-time parameter prep (pad + bf16 cast), then a jitted forward that
    # closes over the prepped constants.
    params = jax.tree_util.tree_map(jax.block_until_ready,
                                    prepare_autoencoder_params(w1, b1, w2, b2))
    forward = jax.jit(functools.partial(autoencoder_forward, params=params))

    out = jax.block_until_ready(forward(x))
    assert out.shape == (B, NQ)

    # Reference: same math with the same bf16 operand rounding, f32 accumulation.
    xb = x.astype(jnp.bfloat16).astype(jnp.float32)
    w1b = w1.astype(jnp.bfloat16).astype(jnp.float32)
    w2b = w2.astype(jnp.bfloat16).astype(jnp.float32)
    enc_ref = jax.nn.sigmoid(xb @ w1b + b1[None, :])
    enc_ref = enc_ref.astype(jnp.bfloat16).astype(jnp.float32)
    ref = jax.nn.sigmoid(enc_ref @ w2b + b2[None, :])
    assert jnp.allclose(out, ref, atol=1e-2, rtol=1e-2), float(
        jnp.max(jnp.abs(out - ref)))

    print("KERNEL_OK")
</pallas_src>

<mosaic_0001>
module attributes {stable_mosaic.version = 11 : i64} {
  func.func @autoencoder_kernel(%arg0: i32, %arg1: memref<256x256xf32, #tpu.memory_space<vmem>>, %arg2: memref<256x128xbf16, #tpu.memory_space<vmem>>, %arg3: memref<1x128xf32, #tpu.memory_space<vmem>>, %arg4: memref<128x256xbf16, #tpu.memory_space<vmem>>, %arg5: memref<1x256xf32, #tpu.memory_space<vmem>>, %arg6: memref<256x256xf32, #tpu.memory_space<vmem>>) attributes {dimension_semantics = [#tpu.dimension_semantics<parallel>], iteration_bounds = array<i64: 2>, scalar_prefetch = 0 : i64, scratch_operands = 0 : i64, tpu.core_type = #tpu.core_type<tc>, window_params = [{transform_indices = @transform_0, window_bounds = array<i64: 256, 256>}, {pipeline_mode = #tpu.pipeline_mode<synchronous>, transform_indices = @transform_1, window_bounds = array<i64: 256, 128>}, {pipeline_mode = #tpu.pipeline_mode<synchronous>, transform_indices = @transform_2, window_bounds = array<i64: 1, 128>}, {pipeline_mode = #tpu.pipeline_mode<synchronous>, transform_indices = @transform_3, window_bounds = array<i64: 128, 256>}, {pipeline_mode = #tpu.pipeline_mode<synchronous>, transform_indices = @transform_4, window_bounds = array<i64: 1, 256>}, {transform_indices = @transform_5, window_bounds = array<i64: 256, 256>}]} {
    %c0 = arith.constant 0 : index
    %c0_0 = arith.constant 0 : index
    %0 = vector.load %arg1[%c0, %c0_0] : memref<256x256xf32, #tpu.memory_space<vmem>>, vector<256x256xf32>
    %1 = arith.truncf %0 : vector<256x256xf32> to vector<256x256xbf16>
    %c0_1 = arith.constant 0 : index
    %c0_2 = arith.constant 0 : index
    %2 = vector.load %arg2[%c0_1, %c0_2] : memref<256x128xbf16, #tpu.memory_space<vmem>>, vector<256x128xbf16>
    %cst = arith.constant dense<0.000000e+00> : vector<256x128xf32>
    %3 = tpu.matmul %1, %2, %cst {dimension_numbers = #tpu.dot_dimension_numbers<[1], [0], [0], [1], [0, 0, 1, 1], [], []>} : vector<256x256xbf16>, vector<256x128xbf16>, vector<256x128xf32> -> vector<256x128xf32>
    %c0_3 = arith.constant 0 : index
    %c0_4 = arith.constant 0 : index
    %4 = vector.load %arg3[%c0_3, %c0_4] : memref<1x128xf32, #tpu.memory_space<vmem>>, vector<1x128xf32>
    %5 = vector.broadcast %4 : vector<1x128xf32> to vector<256x128xf32>
    %6 = arith.addf %3, %5 : vector<256x128xf32>
    %cst_5 = arith.constant 5.000000e-01 : f32
    %7 = vector.broadcast %cst_5 : f32 to vector<256x128xf32>
    %8 = arith.mulf %7, %6 : vector<256x128xf32>
    %9 = math.tanh %8 : vector<256x128xf32>
    %cst_6 = arith.constant 1.000000e+00 : f32
    %10 = vector.broadcast %cst_6 : f32 to vector<256x128xf32>
    %11 = arith.addf %9, %10 : vector<256x128xf32>
    %cst_7 = arith.constant 5.000000e-01 : f32
    %12 = vector.broadcast %cst_7 : f32 to vector<256x128xf32>
    %13 = arith.mulf %12, %11 : vector<256x128xf32>
    %14 = arith.truncf %13 : vector<256x128xf32> to vector<256x128xbf16>
    %c0_8 = arith.constant 0 : index
    %c0_9 = arith.constant 0 : index
    %15 = vector.load %arg4[%c0_8, %c0_9] : memref<128x256xbf16, #tpu.memory_space<vmem>>, vector<128x256xbf16>
    %cst_10 = arith.constant dense<0.000000e+00> : vector<256x256xf32>
    %16 = tpu.matmul %14, %15, %cst_10 {dimension_numbers = #tpu.dot_dimension_numbers<[1], [0], [0], [1], [0, 0, 1, 1], [], []>} : vector<256x128xbf16>, vector<128x256xbf16>, vector<256x256xf32> -> vector<256x256xf32>
    %c0_11 = arith.constant 0 : index
    %c0_12 = arith.constant 0 : index
    %17 = vector.load %arg5[%c0_11, %c0_12] : memref<1x256xf32, #tpu.memory_space<vmem>>, vector<1x256xf32>
    %18 = vector.broadcast %17 : vector<1x256xf32> to vector<256x256xf32>
    %19 = arith.addf %16, %18 : vector<256x256xf32>
    %cst_13 = arith.constant 5.000000e-01 : f32
    %20 = vector.broadcast %cst_13 : f32 to vector<256x256xf32>
    %21 = arith.mulf %20, %19 : vector<256x256xf32>
    %22 = math.tanh %21 : vector<256x256xf32>
    %cst_14 = arith.constant 1.000000e+00 : f32
    %23 = vector.broadcast %cst_14 : f32 to vector<256x256xf32>
    %24 = arith.addf %22, %23 : vector<256x256xf32>
    %cst_15 = arith.constant 5.000000e-01 : f32
    %25 = vector.broadcast %cst_15 : f32 to vector<256x256xf32>
    %26 = arith.mulf %25, %24 : vector<256x256xf32>
    %c0_16 = arith.constant 0 : index
    %c0_17 = arith.constant 0 : index
    %27 = vector.load %arg6[%c0_16, %c0_17] : memref<256x256xf32, #tpu.memory_space<vmem>>, vector<256x256xf32>
    tpu.vector_store %arg6[%c0_16, %c0_17], %26 {strides = array<i32>} : memref<256x256xf32, #tpu.memory_space<vmem>>, vector<256x256xf32>,
    return
  }
  func.func @transform_0(%arg0: i32) -> (i32, i32) {
    %c0_i32 = arith.constant 0 : i32
    %c0_i32_0 = arith.constant 0 : i32
    return %arg0, %c0_i32 : i32, i32
  }
  func.func @transform_1(%arg0: i32) -> (i32, i32) {
    %c0_i32 = arith.constant 0 : i32
    %c0_i32_0 = arith.constant 0 : i32
    %c0_i32_1 = arith.constant 0 : i32
    return %c0_i32, %c0_i32_0 : i32, i32
  }
  func.func @transform_2(%arg0: i32) -> (i32, i32) {
    %c0_i32 = arith.constant 0 : i32
    %c0_i32_0 = arith.constant 0 : i32
    %c0_i32_1 = arith.constant 0 : i32
    return %c0_i32, %c0_i32_0 : i32, i32
  }
  func.func @transform_3(%arg0: i32) -> (i32, i32) {
    %c0_i32 = arith.constant 0 : i32
    %c0_i32_0 = arith.constant 0 : i32
    %c0_i32_1 = arith.constant 0 : i32
    return %c0_i32, %c0_i32_0 : i32, i32
  }
  func.func @transform_4(%arg0: i32) -> (i32, i32) {
    %c0_i32 = arith.constant 0 : i32
    %c0_i32_0 = arith.constant 0 : i32
    %c0_i32_1 = arith.constant 0 : i32
    return %c0_i32, %c0_i32_0 : i32, i32
  }
  func.func @transform_5(%arg0: i32) -> (i32, i32) {
    %c0_i32 = arith.constant 0 : i32
    %c0_i32_0 = arith.constant 0 : i32
    return %arg0, %c0_i32 : i32, i32
  }
}

</mosaic_0001>

<llo_original>
// kernel: autoencoder_forward.1
$region0: #{autoencoder_forward.1}
  #allocation0 [shape = 'u32[]', space=smem, size = 0x4, offset = 0x4, fixed_abs, tag = 'smem constant byte address 0x4 - core index']
  #allocation1 [shape = 'u32[144,128]{1,0:T(1,128)}', space=vmem, size = 0x12000, scoped, tag = 'internal scratch']
  %s0 = inlined_call_operand.hbm [shape: f32[512,256], index: 0, kind: input, shape index: {}]
  %s1 = inlined_call_operand.vmem [shape: bf16[256,128], index: 1, kind: input, shape index: {}]
  %s2 = inlined_call_operand.vmem [shape: f32[1,128], index: 2, kind: input, shape index: {}]
  %s3 = inlined_call_operand.vmem [shape: bf16[128,256], index: 3, kind: input, shape index: {}]
  %s4 = inlined_call_operand.vmem [shape: f32[1,256], index: 4, kind: input, shape index: {}]
  %s5 = inlined_call_operand.hbm [shape: f32[512,256], index: 5, kind: output, shape index: {}]
  %s6 = sld [smem:[#allocation0]]
  $region57: #{autoencoder_forward.1} parent=0
    _
  %s8 = ssub.s32 1, %s6
  %s9 = scalar_select 0, %s8, %s6
  $region1: #{autoencoder_forward.1} parent=0
    #allocation2 [shape = 'u8[524288]{0}', space=vmem, size = 0x80000, scoped, tag = 'input window, operand 0']
    #allocation3 [shape = 's32[2]{0}', space=sflag, size = 0x8, scoped, tag = 'scoped memory for autoencoder_forward.1']
    #allocation4 [shape = 's32[2]{0}', space=sflag, size = 0x8, scoped, tag = 'scoped memory for autoencoder_forward.1']
    #allocation5 [shape = 'u8[524288]{0}', space=vmem, size = 0x80000, scoped, tag = 'output window, operand 0']
    %10 = vsyncpa [#allocation3], 0
    %s11 = scalar_lea.sflag [#allocation3], 1
    %12 = vsyncpa %s11, 0
    %13 = vsyncpa [#allocation4], 0
    %s14 = scalar_lea.sflag [#allocation4], 1
    %15 = vsyncpa %s14, 0
    loop: start=0, step=1, limit=4
    $region2: #{autoencoder_forward.1} parent=1 // loop_pre_header
      _
    $region3: #{autoencoder_forward.1} parent=1 // loop_header
      %s17 = sphi 0, %s21
      %p18 = scmp.ge.s32.totalorder %s17, 4
      %s27 = sphi 0, %s29
      %s30 = sphi 0, %s27
      %s31 = sphi 0, %s30
      %s47 = sphi 0, %s31
      %s51 = sphi 0, %s51
      %s53 = sphi 0, %s51
      %s54 = sphi 0, %s53
      %s68 = sphi 0, %s54
      %s72 = sphi 0, %s72
      %s74 = sphi 0, %s72
      %s75 = sphi 0, %s74
      %s89 = sphi 0, %s75
      %s93 = sphi 0, %s93
      %s95 = sphi 0, %s93
      %s96 = sphi 0, %s95
      %s110 = sphi 0, %s96
      %s114 = sphi 0, %s114
      %s116 = sphi 0, %s114
      %s117 = sphi 0, %s116
      %s131 = sphi 0, %s117
      %s137 = sphi 0, %s139
      %s140 = sphi 0, %s137
      %s141 = sphi 0, %s140
      %s157 = sphi 0, %s141
    $region4: #{autoencoder_forward.1} parent=1 // loop_header_branch
      %20 = sbr.rel (%p18) target = $region8
    $region5: #{autoencoder_forward.1} parent=1 // loop_body
      %s22 = ssub.s32 %s17, 1
      %s23 = ssub.s32 %s17, 2
      %s24 = sadd.s32 %s17, 1
      %s25 = ssub.s32 %s17, %s24
      %p26 = scmp.eq.s32.totalorder %s25, 0
      %s28 = sadd.s32 %s27, 1
      %s29 = scalar_select %p26, %s27, %s28
      %p32 = pneg %p26
      %p33 = scmp.eq.s32.totalorder %s17, 1
      %p34 = por %p32, %p33
      %p35 = scmp.ne.s32.totalorder %s27, %s30
      %p36 = scmp.eq.s32.totalorder %s17, 0
      %p37 = por %p35, %p36
      %p38 = scmp.ne.s32.totalorder %s27, %s30
      %p39 = scmp.eq.s32.totalorder %s22, 1
      %p40 = por %p38, %p39
      %p41 = scmp.ne.s32.totalorder %s30, %s31
      %p42 = scmp.eq.s32.totalorder %s22, 0
      %p43 = por %p41, %p42
      %p44 = scmp.ne.s32.totalorder %s30, %s31
      %p45 = scmp.eq.s32.totalorder %s23, 1
      %p46 = por %p44, %p45
      %p48 = scmp.ne.s32.totalorder %s31, %s47
      %p49 = scmp.eq.s32.totalorder %s23, 0
      %p50 = por %p48, %p49
      %s52 = sadd.s32 %s51, 1
      %p55 = scmp.eq.s32.totalorder %s17, 1
      %p56 = scmp.ne.s32.totalorder %s51, %s53
      %p57 = scmp.eq.s32.totalorder %s17, 0
      %p58 = por %p56, %p57
      %p59 = scmp.ne.s32.totalorder %s51, %s53
      %p60 = scmp.eq.s32.totalorder %s22, 1
      %p61 = por %p59, %p60
      %p62 = scmp.ne.s32.totalorder %s53, %s54
      %p63 = scmp.eq.s32.totalorder %s22, 0
      %p64 = por %p62, %p63
      %p65 = scmp.ne.s32.totalorder %s53, %s54
      %p66 = scmp.eq.s32.totalorder %s23, 1
      %p67 = por %p65, %p66
      %p69 = scmp.ne.s32.totalorder %s54, %s68
      %p70 = scmp.eq.s32.totalorder %s23, 0
      %p71 = por %p69, %p70
      %s73 = sadd.s32 %s72, 1
      %p76 = scmp.eq.s32.totalorder %s17, 1
      %p77 = scmp.ne.s32.totalorder %s72, %s74
      %p78 = scmp.eq.s32.totalorder %s17, 0
      %p79 = por %p77, %p78
      %p80 = scmp.ne.s32.totalorder %s72, %s74
      %p81 = scmp.eq.s32.totalorder %s22, 1
      %p82 = por %p80, %p81
      %p83 = scmp.ne.s32.totalorder %s74, %s75
      %p84 = scmp.eq.s32.totalorder %s22, 0
      %p85 = por %p83, %p84
      %p86 = scmp.ne.s32.totalorder %s74, %s75
      %p87 = scmp.eq.s32.totalorder %s23, 1
      %p88 = por %p86, %p87
      %p90 = scmp.ne.s32.totalorder %s75, %s89
      %p91 = scmp.eq.s32.totalorder %s23, 0
      %p92 = por %p90, %p91
      %s94 = sadd.s32 %s93, 1
      %p97 = scmp.eq.s32.totalorder %s17, 1
      %p98 = scmp.ne.s32.totalorder %s93, %s95
      %p99 = scmp.eq.s32.totalorder %s17, 0
      %p100 = por %p98, %p99
      %p101 = scmp.ne.s32.totalorder %s93, %s95
      %p102 = scmp.eq.s32.totalorder %s22, 1
      %p103 = por %p101, %p102
      %p104 = scmp.ne.s32.totalorder %s95, %s96
      %p105 = scmp.eq.s32.totalorder %s22, 0
      %p106 = por %p104, %p105
      %p107 = scmp.ne.s32.totalorder %s95, %s96
      %p108 = scmp.eq.s32.totalorder %s23, 1
      %p109 = por %p107, %p108
      %p111 = scmp.ne.s32.totalorder %s96, %s110
      %p112 = scmp.eq.s32.totalorder %s23, 0
      %p113 = por %p111, %p112
      %s115 = sadd.s32 %s114, 1
      %p118 = scmp.eq.s32.totalorder %s17, 1
      %p119 = scmp.ne.s32.totalorder %s114, %s116
      %p120 = scmp.eq.s32.totalorder %s17, 0
      %p121 = por %p119, %p120
      %p122 = scmp.ne.s32.totalorder %s114, %s116
      %p123 = scmp.eq.s32.totalorder %s22, 1
      %p124 = por %p122, %p123
      %p125 = scmp.ne.s32.totalorder %s116, %s117
      %p126 = scmp.eq.s32.totalorder %s22, 0
      %p127 = por %p125, %p126
      %p128 = scmp.ne.s32.totalorder %s116, %s117
      %p129 = scmp.eq.s32.totalorder %s23, 1
      %p130 = por %p128, %p129
      %p132 = scmp.ne.s32.totalorder %s117, %s131
      %p133 = scmp.eq.s32.totalorder %s23, 0
      %p134 = por %p132, %p133
      %s135 = ssub.s32 %s17, %s24
      %p136 = scmp.eq.s32.totalorder %s135, 0
      %s138 = sadd.s32 %s137, 1
      %s139 = scalar_select %p136, %s137, %s138
      %p142 = pneg %p136
      %p143 = scmp.eq.s32.totalorder %s17, 1
      %p144 = por %p142, %p143
      %p145 = scmp.ne.s32.totalorder %s137, %s140
      %p146 = scmp.eq.s32.totalorder %s17, 0
      %p147 = por %p145, %p146
      %p148 = scmp.ne.s32.totalorder %s137, %s140
      %p149 = scmp.eq.s32.totalorder %s22, 1
      %p150 = por %p148, %p149
      %p151 = scmp.ne.s32.totalorder %s140, %s141
      %p152 = scmp.eq.s32.totalorder %s22, 0
      %p153 = por %p151, %p152
      %p154 = scmp.ne.s32.totalorder %s140, %s141
      %p155 = scmp.eq.s32.totalorder %s23, 1
      %p156 = por %p154, %p155
      %p158 = scmp.ne.s32.totalorder %s141, %s157
      %p159 = scmp.eq.s32.totalorder %s23, 0
      %p160 = por %p158, %p159
      %p161 = scmp.le.s32.totalorder 1, %s17
      %p162 = scmp.lt.s32.totalorder %s17, 3
      %p163 = pnand %p161, %p162
      %p164 = pneg %p163
      // Predicated region
      $region9: #{autoencoder_forward.1} parent=5 // pred_check
        _
      $region10: #{autoencoder_forward.1} parent=5 // pred_check_branch
        %166 = sbr.rel (%p163) target = $region12
      $region11: #{autoencoder_forward.1} parent=5 // pred_region
        %s167 = ssub.s32 %s17, 1
        // Predicated region
        $region13: #{autoencoder_forward.1} parent=11 // pred_check
          %p168 = pneg %p64
        $region14: #{autoencoder_forward.1} parent=11 // pred_check_branch
          %170 = sbr.rel (%p168) target = $region16
        $region15: #{autoencoder_forward.1} parent=11 // pred_region
          _
        $region16: #{autoencoder_forward.1} parent=11 // pred_fallthru
          _
        // Predicated region
        $region17: #{autoencoder_forward.1} parent=11 // pred_check
          %p171 = pneg %p85
        $region18: #{autoencoder_forward.1} parent=11 // pred_check_branch
          %173 = sbr.rel (%p171) target = $region20
        $region19: #{autoencoder_forward.1} parent=11 // pred_region
          _
        $region20: #{autoencoder_forward.1} parent=11 // pred_fallthru
          _
        // Predicated region
        $region21: #{autoencoder_forward.1} parent=11 // pred_check
          %p174 = pneg %p106
        $region22: #{autoencoder_forward.1} parent=11 // pred_check_branch
          %176 = sbr.rel (%p174) target = $region24
        $region23: #{autoencoder_forward.1} parent=11 // pred_region
          _
        $region24: #{autoencoder_forward.1} parent=11 // pred_fallthru
          _
        // Predicated region
        $region25: #{autoencoder_forward.1} parent=11 // pred_check
          %p177 = pneg %p127
        $region26: #{autoencoder_forward.1} parent=11 // pred_check_branch
          %179 = sbr.rel (%p177) target = $region28
        $region27: #{autoencoder_forward.1} parent=11 // pred_region
          _
        $region28: #{autoencoder_forward.1} parent=11 // pred_fallthru
          _
      $region12: #{autoencoder_forward.1} parent=5 // pred_fallthru
        _
      %p180 = scmp.lt.s32.totalorder %s17, 2
      // Predicated region
      $region29: #{autoencoder_forward.1} parent=5 // pred_check
        %p181 = pneg %p180
      $region30: #{autoencoder_forward.1} parent=5 // pred_check_branch
        %183 = sbr.rel (%p181) target = $region32
      $region31: #{autoencoder_forward.1} parent=5 // pred_region
        // Predicated region
        $region33: #{autoencoder_forward.1} parent=31 // pred_check
          %p184 = pneg %p37
        $region34: #{autoencoder_forward.1} parent=31 // pred_check_branch
          %186 = sbr.rel (%p184) target = $region36
        $region35: #{autoencoder_forward.1} parent=31 // pred_region
          %s187 = sand.u32 %s27, 1
          %s188 = scalar_lea.sflag [#allocation3], %s187
          %s189 = sand.u32 %s27, 1
          %s190 = smul.addr %s189, 512
          %s191 = scalar_lea.vmem [#allocation2], %s190
          %s192 = smul.u32 32, %s17
          %s194 = ssub.s32 8192, 8192
          %195 = vsyncadd %s188, %s194
          %s196 = smul.addr %s192, 2
          %s197 = smul.addr %s196, 128
          %s198 = scalar_lea.hbm %s0, %s197
          %s199 = sshll.u32 %s191, 4
          %s200 = int_to_ptr.vmem [resolvable:$true] %s199
          %205 = dma.hbm_to_vmem [thread:$0]  %s198, 8192, %s200, %s188, 256, 256, 16
        $region36: #{autoencoder_forward.1} parent=31 // pred_fallthru
          _
      $region32: #{autoencoder_forward.1} parent=5 // pred_fallthru
        _
      %p206 = scmp.le.s32.totalorder 1, %s17
      %p207 = scmp.lt.s32.totalorder %s17, 3
      %p208 = pnand %p206, %p207
      %p209 = pneg %p208
      // Predicated region
      $region37: #{autoencoder_forward.1} parent=5 // pred_check
        _
      $region38: #{autoencoder_forward.1} parent=5 // pred_check_branch
        %211 = sbr.rel (%p208) target = $region40
      $region39: #{autoencoder_forward.1} parent=5 // pred_region
        %s212 = ssub.s32 %s17, 1
        %s213 = sand.u32 %s30, 1
        %s214 = scalar_lea.sflag [#allocation3], %s213
        %s215 = sand.u32 %s30, 1
        %s216 = smul.addr %s215, 512
        %s217 = scalar_lea.vmem [#allocation2], %s216
        // Predicated region
        $region41: #{autoencoder_forward.1} parent=39 // pred_check
          %p218 = pneg %p43
        $region42: #{autoencoder_forward.1} parent=39 // pred_check_branch
          %220 = sbr.rel (%p218) target = $region44
        $region43: #{autoencoder_forward.1} parent=39 // pred_region
          %221 = dma.done %s214, 8192
        $region44: #{autoencoder_forward.1} parent=39 // pred_fallthru
          _
        %s222 = sand.u32 %s30, 1
        %s223 = scalar_lea.sflag [#allocation3], %s222
        %s224 = sand.u32 %s30, 1
        %s225 = smul.addr %s224, 512
        %s226 = scalar_lea.vmem [#allocation2], %s225
        %p227 = pneg %p43
        %p228 = pneg %p40
        %p229 = pneg %p64
        %p230 = pneg %p61
        %p231 = pneg %p85
        %p232 = pneg %p82
        %p233 = pneg %p106
        %p234 = pneg %p103
        %p235 = pneg %p127
        %p236 = pneg %p124
        %p237 = pneg %p153
        %p238 = pneg %p150
        %s239 = sand.u32 %s140, 1
        %s240 = scalar_lea.sflag [#allocation4], %s239
        %s241 = sand.u32 %s140, 1
        %s242 = smul.addr %s241, 512
        %s243 = scalar_lea.vmem [#allocation5], %s242
        %s244 = smul.u32 32, %s22
        %s245 = smul.u32 32, %s22
        %v247 = vld [vmem:[%s217] sm:$0xff]
        %v248 = vld [vmem:[%s217 + $0x8] sm:$0xff]
        %v249 = vld [vmem:[%s217 + $0x10] sm:$0xff]
        %v250 = vld [vmem:[%s217 + $0x18] sm:$0xff]
        %v251 = vld [vmem:[%s217 + $0x20] sm:$0xff]
        %v252 = vld [vmem:[%s217 + $0x28] sm:$0xff]
        %v253 = vld [vmem:[%s217 + $0x30] sm:$0xff]
        %v254 = vld [vmem:[%s217 + $0x38] sm:$0xff]
        %v255 = vld [vmem:[%s217 + $0x40] sm:$0xff]
        %v256 = vld [vmem:[%s217 + $0x48] sm:$0xff]
        %v257 = vld [vmem:[%s217 + $0x50] sm:$0xff]
        %v258 = vld [vmem:[%s217 + $0x58] sm:$0xff]
        %v259 = vld [vmem:[%s217 + $0x60] sm:$0xff]
        %v260 = vld [vmem:[%s217 + $0x68] sm:$0xff]
        %v261 = vld [vmem:[%s217 + $0x70] sm:$0xff]
        %v262 = vld [vmem:[%s217 + $0x78] sm:$0xff]
        %v263 = vld [vmem:[%s217 + $0x80] sm:$0xff]
        %v264 = vld [vmem:[%s217 + $0x88] sm:$0xff]
        %v265 = vld [vmem:[%s217 + $0x90] sm:$0xff]
        %v266 = vld [vmem:[%s217 + $0x98] sm:$0xff]
        %v267 = vld [vmem:[%s217 + $0xa0] sm:$0xff]
        %v268 = vld [vmem:[%s217 + $0xa8] sm:$0xff]
        %v269 = vld [vmem:[%s217 + $0xb0] sm:$0xff]
        %v270 = vld [vmem:[%s217 + $0xb8] sm:$0xff]
        %v271 = vld [vmem:[%s217 + $0xc0] sm:$0xff]
        %v272 = vld [vmem:[%s217 + $0xc8] sm:$0xff]
        %v273 = vld [vmem:[%s217 + $0xd0] sm:$0xff]
        %v274 = vld [vmem:[%s217 + $0xd8] sm:$0xff]
        %v275 = vld [vmem:[%s217 + $0xe0] sm:$0xff]
        %v276 = vld [vmem:[%s217 + $0xe8] sm:$0xff]
        %v277 = vld [vmem:[%s217 + $0xf0] sm:$0xff]
        %v278 = vld [vmem:[%s217 + $0xf8] sm:$0xff]
        %v279 = vld [vmem:[%s217 + $0x100] sm:$0xff]
        %v280 = vld [vmem:[%s217 + $0x108] sm:$0xff]
        %v281 = vld [vmem:[%s217 + $0x110] sm:$0xff]
        %v282 = vld [vmem:[%s217 + $0x118] sm:$0xff]
        %v283 = vld [vmem:[%s217 + $0x120] sm:$0xff]
        %v284 = vld [vmem:[%s217 + $0x128] sm:$0xff]
        %v285 = vld [vmem:[%s217 + $0x130] sm:$0xff]
        %v286 = vld [vmem:[%s217 + $0x138] sm:$0xff]
        %v287 = vld [vmem:[%s217 + $0x140] sm:$0xff]
        %v288 = vld [vmem:[%s217 + $0x148] sm:$0xff]
        %v289 = vld [vmem:[%s217 + $0x150] sm:$0xff]
        %v290 = vld [vmem:[%s217 + $0x158] sm:$0xff]
        %v291 = vld [vmem:[%s217 + $0x160] sm:$0xff]
        %v292 = vld [vmem:[%s217 + $0x168] sm:$0xff]
        %v293 = vld [vmem:[%s217 + $0x170] sm:$0xff]
        %v294 = vld [vmem:[%s217 + $0x178] sm:$0xff]
        %v295 = vld [vmem:[%s217 + $0x180] sm:$0xff]
        %v296 = vld [vmem:[%s217 + $0x188] sm:$0xff]
        %v297 = vld [vmem:[%s217 + $0x190] sm:$0xff]
        %v298 = vld [vmem:[%s217 + $0x198] sm:$0xff]
        %v299 = vld [vmem:[%s217 + $0x1a0] sm:$0xff]
        %v300 = vld [vmem:[%s217 + $0x1a8] sm:$0xff]
        %v301 = vld [vmem:[%s217 + $0x1b0] sm:$0xff]
        %v302 = vld [vmem:[%s217 + $0x1b8] sm:$0xff]
        %v303 = vld [vmem:[%s217 + $0x1c0] sm:$0xff]
        %v304 = vld [vmem:[%s217 + $0x1c8] sm:$0xff]
        %v305 = vld [vmem:[%s217 + $0x1d0] sm:$0xff]
        %v306 = vld [vmem:[%s217 + $0x1d8] sm:$0xff]
        %v307 = vld [vmem:[%s217 + $0x1e0] sm:$0xff]
        %v308 = vld [vmem:[%s217 + $0x1e8] sm:$0xff]
        %v309 = vld [vmem:[%s217 + $0x1f0] sm:$0xff]
        %v310 = vld [vmem:[%s217 + $0x1f8] sm:$0xff]
        %v311 = vpack.c.bf16 %v249, %v247
        %v312 = vpack.c.bf16 %v250, %v248
        %v313 = vpack.c.bf16 %v253, %v251
        %v314 = vpack.c.bf16 %v254, %v252
        %v315 = vpack.c.bf16 %v257, %v255
        %v316 = vpack.c.bf16 %v258, %v256
        %v317 = vpack.c.bf16 %v261, %v259
        %v318 = vpack.c.bf16 %v262, %v260
        %v319 = vpack.c.bf16 %v265, %v263
        %v320 = vpack.c.bf16 %v266, %v264
        %v321 = vpack.c.bf16 %v269, %v267
        %v322 = vpack.c.bf16 %v270, %v268
        %v323 = vpack.c.bf16 %v273, %v271
        %v324 = vpack.c.bf16 %v274, %v272
        %v325 = vpack.c.bf16 %v277, %v275
        %v326 = vpack.c.bf16 %v278, %v276
        %v327 = vpack.c.bf16 %v281, %v279
        %v328 = vpack.c.bf16 %v282, %v280
        %v329 = vpack.c.bf16 %v285, %v283
        %v330 = vpack.c.bf16 %v286, %v284
        %v331 = vpack.c.bf16 %v289, %v287
        %v332 = vpack.c.bf16 %v290, %v288
        %v333 = vpack.c.bf16 %v293, %v291
        %v334 = vpack.c.bf16 %v294, %v292
        %v335 = vpack.c.bf16 %v297, %v295
        %v336 = vpack.c.bf16 %v298, %v296
        %v337 = vpack.c.bf16 %v301, %v299
        %v338 = vpack.c.bf16 %v302, %v300
        %v339 = vpack.c.bf16 %v305, %v303
        %v340 = vpack.c.bf16 %v306, %v304
        %v341 = vpack.c.bf16 %v309, %v307
        %v342 = vpack.c.bf16 %v310, %v308
        %v343 = vld [vmem:[%s1] sm:$0xf]
        %v344 = vld [vmem:[%s1 + $0x4] sm:$0xf]
        %v345 = vld [vmem:[%s1 + $0x8] sm:$0xf]
        %v346 = vld [vmem:[%s1 + $0xc] sm:$0xf]
        %v347 = vld [vmem:[%s1 + $0x10] sm:$0xf]
        %v348 = vld [vmem:[%s1 + $0x14] sm:$0xf]
        %v349 = vld [vmem:[%s1 + $0x18] sm:$0xf]
        %v350 = vld [vmem:[%s1 + $0x1c] sm:$0xf]
        %v351 = vld [vmem:[%s1 + $0x20] sm:$0xf]
        %v352 = vld [vmem:[%s1 + $0x24] sm:$0xf]
        %v353 = vld [vmem:[%s1 + $0x28] sm:$0xf]
        %v354 = vld [vmem:[%s1 + $0x2c] sm:$0xf]
        %v355 = vld [vmem:[%s1 + $0x30] sm:$0xf]
        %v356 = vld [vmem:[%s1 + $0x34] sm:$0xf]
        %v357 = vld [vmem:[%s1 + $0x38] sm:$0xf]
        %v358 = vld [vmem:[%s1 + $0x3c] sm:$0xf]
        %v359 = vld [vmem:[%s1 + $0x40] sm:$0xf]
        %v360 = vld [vmem:[%s1 + $0x44] sm:$0xf]
        %v361 = vld [vmem:[%s1 + $0x48] sm:$0xf]
        %v362 = vld [vmem:[%s1 + $0x4c] sm:$0xf]
        %v363 = vld [vmem:[%s1 + $0x50] sm:$0xf]
        %v364 = vld [vmem:[%s1 + $0x54] sm:$0xf]
        %v365 = vld [vmem:[%s1 + $0x58] sm:$0xf]
        %v366 = vld [vmem:[%s1 + $0x5c] sm:$0xf]
        %v367 = vld [vmem:[%s1 + $0x60] sm:$0xf]
        %v368 = vld [vmem:[%s1 + $0x64] sm:$0xf]
        %v369 = vld [vmem:[%s1 + $0x68] sm:$0xf]
        %v370 = vld [vmem:[%s1 + $0x6c] sm:$0xf]
        %v371 = vld [vmem:[%s1 + $0x70] sm:$0xf]
        %v372 = vld [vmem:[%s1 + $0x74] sm:$0xf]
        %v373 = vld [vmem:[%s1 + $0x78] sm:$0xf]
        %v374 = vld [vmem:[%s1 + $0x7c] sm:$0xf]
        %v375 = vld [vmem:[%s2] sm:$0x1]
        %v377 = vlaneseq
        %v378 = vshrl.u32 %v377, 7
        %v379 = vsub.s32 0, %v378
        %v380 = vrot.slane %v375, %v379
        %v414 = vunpack.c.l.b16 %v343
        %v415 = vunpack.c.l.b16 %v344
        %v416 = vunpack.c.l.b16 %v345
        %v417 = vunpack.c.l.b16 %v346
        %v418 = vunpack.c.l.b16 %v347
        %v419 = vunpack.c.l.b16 %v348
        %v420 = vunpack.c.l.b16 %v349
        %v421 = vunpack.c.l.b16 %v350
        %v422 = vunpack.c.l.b16 %v351
        %v423 = vunpack.c.l.b16 %v352
        %v424 = vunpack.c.l.b16 %v353
        %v425 = vunpack.c.l.b16 %v354
        %v426 = vunpack.c.l.b16 %v355
        %v427 = vunpack.c.l.b16 %v356
        %v428 = vunpack.c.l.b16 %v357
        %v429 = vunpack.c.l.b16 %v358
        %v430 = vunpack.c.l.b16 %v359
        %v431 = vunpack.c.l.b16 %v360
        %v432 = vunpack.c.l.b16 %v361
        %v433 = vunpack.c.l.b16 %v362
        %v434 = vunpack.c.l.b16 %v363
        %v435 = vunpack.c.l.b16 %v364
        %v436 = vunpack.c.l.b16 %v365
        %v437 = vunpack.c.l.b16 %v366
        %v438 = vunpack.c.l.b16 %v367
        %v439 = vunpack.c.l.b16 %v368
        %v440 = vunpack.c.l.b16 %v369
        %v441 = vunpack.c.l.b16 %v370
        %v442 = vunpack.c.l.b16 %v371
        %v443 = vunpack.c.l.b16 %v372
        %v444 = vunpack.c.l.b16 %v373
        %v445 = vunpack.c.l.b16 %v374
        %v446 = vpack.c.b16 %v415, %v414
        %v447 = vpack.c.b16 %v417, %v416
        %v448 = vpack.c.b16 %v419, %v418
        %v449 = vpack.c.b16 %v421, %v420
        %v450 = vpack.c.b16 %v423, %v422
        %v451 = vpack.c.b16 %v425, %v424
        %v452 = vpack.c.b16 %v427, %v426
        %v453 = vpack.c.b16 %v429, %v428
        %v454 = vpack.c.b16 %v431, %v430
        %v455 = vpack.c.b16 %v433, %v432
        %v456 = vpack.c.b16 %v435, %v434
        %v457 = vpack.c.b16 %v437, %v436
        %v458 = vpack.c.b16 %v439, %v438
        %v459 = vpack.c.b16 %v441, %v440
        %v460 = vpack.c.b16 %v443, %v442
        %v461 = vpack.c.b16 %v445, %v444
        %478 = vmatprep.subr.bf16.mxu0 0
        %479 = vmatpush1.bf16.msra.mxu0 %v446
        %480 = vmatprep.subr.bf16.mxu0 0
        %481 = vmatpush1.bf16.msra.mxu0 %v447
        %482 = vmatprep.subr.bf16.mxu0 0
        %483 = vmatpush1.bf16.msra.mxu0 %v448
        %484 = vmatprep.subr.bf16.mxu0 0
        %485 = vmatpush1.bf16.msra.mxu0 %v449
        %486 = vmatprep.subr.bf16.mxu0 0
        %487 = vmatpush1.bf16.msra.mxu0 %v450
        %488 = vmatprep.subr.bf16.mxu0 0
        %489 = vmatpush1.bf16.msra.mxu0 %v451
        %490 = vmatprep.subr.bf16.mxu0 0
        %491 = vmatpush1.bf16.msra.mxu0 %v452
        %492 = vmatprep.subr.bf16.mxu0 0
        %493 = vmatpush1.bf16.msra.mxu0 %v453
        %494 = vmatprep.subr.bf16.mxu0 0
        %495 = vmatpush1.bf16.msra.mxu0 %v454
        %496 = vmatprep.subr.bf16.mxu0 0
        %497 = vmatpush1.bf16.msra.mxu0 %v455
        %498 = vmatprep.subr.bf16.mxu0 0
        %499 = vmatpush1.bf16.msra.mxu0 %v456
        %500 = vmatprep.subr.bf16.mxu0 0
        %501 = vmatpush1.bf16.msra.mxu0 %v457
        %502 = vmatprep.subr.bf16.mxu0 0
        %503 = vmatpush1.bf16.msra.mxu0 %v458
        %504 = vmatprep.subr.bf16.mxu0 0
        %505 = vmatpush1.bf16.msra.mxu0 %v459
        %506 = vmatprep.subr.bf16.mxu0 0
        %507 = vmatpush1.bf16.msra.mxu0 %v460
        %508 = vmatprep.subr.bf16.mxu0 0
        %509 = vmatpush1.bf16.msra.mxu0 %v461
        %510 = vmatprep.mubr.bf16.mxu0 %v312
        %511 = vmatmul.mubr.bf16.gmra.mrb[0].mxu0 %v311
        %v512 = vpop.f32.mrb[0].mxu0
        %v513 = vadd.f32 %v380, %v512
        %v514 = vpop.f32.mrb[0].mxu0
        %v515 = vpop.f32.mrb[0].mxu0
        %v516 = vadd.f32 %v380, %v515
        %v517 = vpop.f32.mrb[0].mxu0
        %518 = vmatprep.mubr.bf16.mxu0 %v314
        %519 = vmatmul.mubr.bf16.gmra.mrb[0].mxu0 %v313
        %v520 = vpop.f32.mrb[0].mxu0
        %v521 = vadd.f32 %v380, %v520
        %v522 = vpop.f32.mrb[0].mxu0
        %v523 = vpop.f32.mrb[0].mxu0
        %v524 = vadd.f32 %v380, %v523
        %v525 = vpop.f32.mrb[0].mxu0
        %526 = vmatprep.mubr.bf16.mxu0 %v316
        %527 = vmatmul.mubr.bf16.gmra.mrb[0].mxu0 %v315
        %v528 = vpop.f32.mrb[0].mxu0
        %v529 = vadd.f32 %v380, %v528
        %v530 = vpop.f32.mrb[0].mxu0
        %v531 = vpop.f32.mrb[0].mxu0
        %v532 = vadd.f32 %v380, %v531
        %v533 = vpop.f32.mrb[0].mxu0
        %534 = vmatprep.mubr.bf16.mxu0 %v318
        %535 = vmatmul.mubr.bf16.gmra.mrb[0].mxu0 %v317
        %v536 = vpop.f32.mrb[0].mxu0
        %v537 = vadd.f32 %v380, %v536
        %v538 = vpop.f32.mrb[0].mxu0
        %v539 = vpop.f32.mrb[0].mxu0
        %v540 = vadd.f32 %v380, %v539
        %v541 = vpop.f32.mrb[0].mxu0
        %542 = vmatprep.mubr.bf16.mxu0 %v320
        %543 = vmatmul.mubr.bf16.gmra.mrb[0].mxu0 %v319
        %v544 = vpop.f32.mrb[0].mxu0
        %v545 = vadd.f32 %v380, %v544
        %v546 = vpop.f32.mrb[0].mxu0
        %v547 = vpop.f32.mrb[0].mxu0
        %v548 = vadd.f32 %v380, %v547
        %v549 = vpop.f32.mrb[0].mxu0
        %550 = vmatprep.mubr.bf16.mxu0 %v322
        %551 = vmatmul.mubr.bf16.gmra.mrb[0].mxu0 %v321
        %v552 = vpop.f32.mrb[0].mxu0
        %v553 = vadd.f32 %v380, %v552
        %v554 = vpop.f32.mrb[0].mxu0
        %v555 = vpop.f32.mrb[0].mxu0
        %v556 = vadd.f32 %v380, %v555
        %v557 = vpop.f32.mrb[0].mxu0
        %558 = vmatprep.mubr.bf16.mxu0 %v324
        %559 = vmatmul.mubr.bf16.gmra.mrb[0].mxu0 %v323
        %v560 = vpop.f32.mrb[0].mxu0
        %v561 = vadd.f32 %v380, %v560
        %v562 = vpop.f32.mrb[0].mxu0
        %v563 = vpop.f32.mrb[0].mxu0
        %v564 = vadd.f32 %v380, %v563
        %v565 = vpop.f32.mrb[0].mxu0
        %566 = vmatprep.mubr.bf16.mxu0 %v326
        %567 = vmatmul.mubr.bf16.gmra.mrb[0].mxu0 %v325
        %v568 = vpop.f32.mrb[0].mxu0
        %v569 = vadd.f32 %v380, %v568
        %v570 = vpop.f32.mrb[0].mxu0
        %v571 = vpop.f32.mrb[0].mxu0
        %v572 = vadd.f32 %v380, %v571
        %v573 = vpop.f32.mrb[0].mxu0
        %574 = vmatprep.mubr.bf16.mxu0 %v328
        %575 = vmatmul.mubr.bf16.gmra.mrb[0].mxu0 %v327
        %v576 = vpop.f32.mrb[0].mxu0
        %v577 = vadd.f32 %v380, %v576
        %v578 = vpop.f32.mrb[0].mxu0
        %v579 = vpop.f32.mrb[0].mxu0
        %v580 = vadd.f32 %v380, %v579
        %v581 = vpop.f32.mrb[0].mxu0
        %582 = vmatprep.mubr.bf16.mxu0 %v330
        %583 = vmatmul.mubr.bf16.gmra.mrb[0].mxu0 %v329
        %v584 = vpop.f32.mrb[0].mxu0
        %v585 = vadd.f32 %v380, %v584
        %v586 = vpop.f32.mrb[0].mxu0
        %v587 = vpop.f32.mrb[0].mxu0
        %v588 = vadd.f32 %v380, %v587
        %v589 = vpop.f32.mrb[0].mxu0
        %590 = vmatprep.mubr.bf16.mxu0 %v332
        %591 = vmatmul.mubr.bf16.gmra.mrb[0].mxu0 %v331
        %v592 = vpop.f32.mrb[0].mxu0
        %v593 = vadd.f32 %v380, %v592
        %v594 = vpop.f32.mrb[0].mxu0
        %v595 = vpop.f32.mrb[0].mxu0
        %v596 = vadd.f32 %v380, %v595
        %v597 = vpop.f32.mrb[0].mxu0
        %598 = vmatprep.mubr.bf16.mxu0 %v334
        %599 = vmatmul.mubr.bf16.gmra.mrb[0].mxu0 %v333
        %v600 = vpop.f32.mrb[0].mxu0
        %v601 = vadd.f32 %v380, %v600
        %v602 = vpop.f32.mrb[0].mxu0
        %v603 = vpop.f32.mrb[0].mxu0
        %v604 = vadd.f32 %v380, %v603
        %v605 = vpop.f32.mrb[0].mxu0
        %606 = vmatprep.mubr.bf16.mxu0 %v336
        %607 = vmatmul.mubr.bf16.gmra.mrb[0].mxu0 %v335
        %v608 = vpop.f32.mrb[0].mxu0
        %v609 = vadd.f32 %v380, %v608
        %v610 = vpop.f32.mrb[0].mxu0
        %v611 = vpop.f32.mrb[0].mxu0
        %v612 = vadd.f32 %v380, %v611
        %v613 = vpop.f32.mrb[0].mxu0
        %614 = vmatprep.mubr.bf16.mxu0 %v338
        %615 = vmatmul.mubr.bf16.gmra.mrb[0].mxu0 %v337
        %v616 = vpop.f32.mrb[0].mxu0
        %v617 = vadd.f32 %v380, %v616
        %v618 = vpop.f32.mrb[0].mxu0
        %v619 = vpop.f32.mrb[0].mxu0
        %v620 = vadd.f32 %v380, %v619
        %v621 = vpop.f32.mrb[0].mxu0
        %622 = vmatprep.mubr.bf16.mxu0 %v340
        %623 = vmatmul.mubr.bf16.gmra.mrb[0].mxu0 %v339
        %v624 = vpop.f32.mrb[0].mxu0
        %v625 = vadd.f32 %v380, %v624
        %v626 = vpop.f32.mrb[0].mxu0
        %v627 = vpop.f32.mrb[0].mxu0
        %v628 = vadd.f32 %v380, %v627
        %v629 = vpop.f32.mrb[0].mxu0
        %630 = vmatprep.mubr.bf16.mxu0 %v342
        %631 = vmatmul.mubr.bf16.gmra.mrb[0].mxu0 %v341
        %v632 = vpop.f32.mrb[0].mxu0
        %v633 = vadd.f32 %v380, %v632
        %v634 = vpop.f32.mrb[0].mxu0
        %v635 = vpop.f32.mrb[0].mxu0
        %v636 = vadd.f32 %v380, %v635
        %v637 = vpop.f32.mrb[0].mxu0
        %638 = vdwg.mxu0
        %v639 = vmul.f32 %v513, 0.5
        %v640 = vmul.f32 %v516, 0.5
        %v641 = vmul.f32 %v521, 0.5
        %v642 = vmul.f32 %v524, 0.5
        %v643 = vmul.f32 %v529, 0.5
        %v644 = vmul.f32 %v532, 0.5
        %v645 = vmul.f32 %v537, 0.5
        %v646 = vmul.f32 %v540, 0.5
        %v647 = vmul.f32 %v545, 0.5
        %v648 = vmul.f32 %v548, 0.5
        %v649 = vmul.f32 %v553, 0.5
        %v650 = vmul.f32 %v556, 0.5
        %v651 = vmul.f32 %v561, 0.5
        %v652 = vmul.f32 %v564, 0.5
        %v653 = vmul.f32 %v569, 0.5
        %v654 = vmul.f32 %v572, 0.5
        %v655 = vmul.f32 %v577, 0.5
        %v656 = vmul.f32 %v580, 0.5
        %v657 = vmul.f32 %v585, 0.5
        %v658 = vmul.f32 %v588, 0.5
        %v659 = vmul.f32 %v593, 0.5
        %v660 = vmul.f32 %v596, 0.5
        %v661 = vmul.f32 %v601, 0.5
        %v662 = vmul.f32 %v604, 0.5
        %v663 = vmul.f32 %v609, 0.5
        %v664 = vmul.f32 %v612, 0.5
        %v665 = vmul.f32 %v617, 0.5
        %v666 = vmul.f32 %v620, 0.5
        %v667 = vmul.f32 %v625, 0.5
        %v668 = vmul.f32 %v628, 0.5
        %v669 = vmul.f32 %v633, 0.5
        %v670 = vmul.f32 %v636, 0.5
        %v671 = vtanh.pop %v639
        %v672 = vtanh.pop %v640
        %v673 = vtanh.pop %v641
        %v674 = vtanh.pop %v642
        %v675 = vtanh.pop %v643
        %v676 = vtanh.pop %v644
        %v677 = vtanh.pop %v645
        %v678 = vtanh.pop %v646
        %v679 = vtanh.pop %v647
        %v680 = vtanh.pop %v648
        %v681 = vtanh.pop %v649
        %v682 = vtanh.pop %v650
        %v683 = vtanh.pop %v651
        %v684 = vtanh.pop %v652
        %v685 = vtanh.pop %v653
        %v686 = vtanh.pop %v654
        %v687 = vtanh.pop %v655
        %v688 = vtanh.pop %v656
        %v689 = vtanh.pop %v657
        %v690 = vtanh.pop %v658
        %v691 = vtanh.pop %v659
        %v692 = vtanh.pop %v660
        %v693 = vtanh.pop %v661
        %v694 = vtanh.pop %v662
        %v695 = vtanh.pop %v663
        %v696 = vtanh.pop %v664
        %v697 = vtanh.pop %v665
        %v698 = vtanh.pop %v666
        %v699 = vtanh.pop %v667
        %v700 = vtanh.pop %v668
        %v701 = vtanh.pop %v669
        %v702 = vtanh.pop %v670
        %v703 = vadd.f32 %v671, 1.0
        %v704 = vadd.f32 %v672, 1.0
        %v705 = vadd.f32 %v673, 1.0
        %v706 = vadd.f32 %v674, 1.0
        %v707 = vadd.f32 %v675, 1.0
        %v708 = vadd.f32 %v676, 1.0
        %v709 = vadd.f32 %v677, 1.0
        %v710 = vadd.f32 %v678, 1.0
        %v711 = vadd.f32 %v679, 1.0
        %v712 = vadd.f32 %v680, 1.0
        %v713 = vadd.f32 %v681, 1.0
        %v714 = vadd.f32 %v682, 1.0
        %v715 = vadd.f32 %v683, 1.0
        %v716 = vadd.f32 %v684, 1.0
        %v717 = vadd.f32 %v685, 1.0
        %v718 = vadd.f32 %v686, 1.0
        %v719 = vadd.f32 %v687, 1.0
        %v720 = vadd.f32 %v688, 1.0
        %v721 = vadd.f32 %v689, 1.0
        %v722 = vadd.f32 %v690, 1.0
        %v723 = vadd.f32 %v691, 1.0
        %v724 = vadd.f32 %v692, 1.0
        %v725 = vadd.f32 %v693, 1.0
        %v726 = vadd.f32 %v694, 1.0
        %v727 = vadd.f32 %v695, 1.0
        %v728 = vadd.f32 %v696, 1.0
        %v729 = vadd.f32 %v697, 1.0
        %v730 = vadd.f32 %v698, 1.0
        %v731 = vadd.f32 %v699, 1.0
        %v732 = vadd.f32 %v700, 1.0
        %v733 = vadd.f32 %v701, 1.0
        %v734 = vadd.f32 %v702, 1.0
        %v735 = vmul.f32 %v703, 0.5
        %v736 = vmul.f32 %v704, 0.5
        %v737 = vmul.f32 %v705, 0.5
        %v738 = vmul.f32 %v706, 0.5
        %v739 = vmul.f32 %v707, 0.5
        %v740 = vmul.f32 %v708, 0.5
        %v741 = vmul.f32 %v709, 0.5
        %v742 = vmul.f32 %v710, 0.5
        %v743 = vmul.f32 %v711, 0.5
        %v744 = vmul.f32 %v712, 0.5
        %v745 = vmul.f32 %v713, 0.5
        %v746 = vmul.f32 %v714, 0.5
        %v747 = vmul.f32 %v715, 0.5
        %v748 = vmul.f32 %v716, 0.5
        %v749 = vmul.f32 %v717, 0.5
        %v750 = vmul.f32 %v718, 0.5
        %v751 = vmul.f32 %v719, 0.5
        %v752 = vmul.f32 %v720, 0.5
        %v753 = vmul.f32 %v721, 0.5
        %v754 = vmul.f32 %v722, 0.5
        %v755 = vmul.f32 %v723, 0.5
        %v756 = vmul.f32 %v724, 0.5
        %v757 = vmul.f32 %v725, 0.5
        %v758 = vmul.f32 %v726, 0.5
        %v759 = vmul.f32 %v727, 0.5
        %v760 = vmul.f32 %v728, 0.5
        %v761 = vmul.f32 %v729, 0.5
        %v762 = vmul.f32 %v730, 0.5
        %v763 = vmul.f32 %v731, 0.5
        %v764 = vmul.f32 %v732, 0.5
        %v765 = vmul.f32 %v733, 0.5
        %v766 = vmul.f32 %v734, 0.5
        %v767 = vpack.c.bf16 %v736, %v735
        %v768 = vpack.c.bf16 %v738, %v737
        %v769 = vpack.c.bf16 %v740, %v739
        %v770 = vpack.c.bf16 %v742, %v741
        %v771 = vpack.c.bf16 %v744, %v743
        %v772 = vpack.c.bf16 %v746, %v745
        %v773 = vpack.c.bf16 %v748, %v747
        %v774 = vpack.c.bf16 %v750, %v749
        %v775 = vpack.c.bf16 %v752, %v751
        %v776 = vpack.c.bf16 %v754, %v753
        %v777 = vpack.c.bf16 %v756, %v755
        %v778 = vpack.c.bf16 %v758, %v757
        %v779 = vpack.c.bf16 %v760, %v759
        %v780 = vpack.c.bf16 %v762, %v761
        %v781 = vpack.c.bf16 %v764, %v763
        %v782 = vpack.c.bf16 %v766, %v765
        %v783 = vld [vmem:[%s3] sm:$0xff]
        %v784 = vld [vmem:[%s3 + $0x8] sm:$0xff]
        %v785 = vld [vmem:[%s3 + $0x10] sm:$0xff]
        %v786 = vld [vmem:[%s3 + $0x18] sm:$0xff]
        %v787 = vld [vmem:[%s3 + $0x20] sm:$0xff]
        %v788 = vld [vmem:[%s3 + $0x28] sm:$0xff]
        %v789 = vld [vmem:[%s3 + $0x30] sm:$0xff]
        %v790 = vld [vmem:[%s3 + $0x38] sm:$0xff]
        %v791 = vld [vmem:[%s3 + $0x40] sm:$0xff]
        %v792 = vld [vmem:[%s3 + $0x48] sm:$0xff]
        %v793 = vld [vmem:[%s3 + $0x50] sm:$0xff]
        %v794 = vld [vmem:[%s3 + $0x58] sm:$0xff]
        %v795 = vld [vmem:[%s3 + $0x60] sm:$0xff]
        %v796 = vld [vmem:[%s3 + $0x68] sm:$0xff]
        %v797 = vld [vmem:[%s3 + $0x70] sm:$0xff]
        %v798 = vld [vmem:[%s3 + $0x78] sm:$0xff]
        %v799 = vld [vmem:[%s4] sm:$0x3]
        %v801 = vlaneseq
        %v802 = vshrl.u32 %v801, 7
        %v803 = vsub.s32 0, %v802
        %v804 = vrot.slane %v799, %v803
        %v805 = vlaneseq
        %v806 = vshrl.u32 %v805, 7
        %v807 = vsub.s32 1, %v806
        %v808 = vrot.slane %v799, %v807
        %v827 = vunpack.c.l.b16 %v783
        %v828 = vunpack.c.h.b16 %v783
        %v829 = vunpack.c.l.b16 %v784
        %v830 = vunpack.c.h.b16 %v784
        %v831 = vunpack.c.l.b16 %v785
        %v832 = vunpack.c.h.b16 %v785
        %v833 = vunpack.c.l.b16 %v786
        %v834 = vunpack.c.h.b16 %v786
        %v835 = vunpack.c.l.b16 %v787
        %v836 = vunpack.c.h.b16 %v787
        %v837 = vunpack.c.l.b16 %v788
        %v838 = vunpack.c.h.b16 %v788
        %v839 = vunpack.c.l.b16 %v789
        %v840 = vunpack.c.h.b16 %v789
        %v841 = vunpack.c.l.b16 %v790
        %v842 = vunpack.c.h.b16 %v790
        %v843 = vunpack.c.l.b16 %v791
        %v844 = vunpack.c.h.b16 %v791
        %v845 = vunpack.c.l.b16 %v792
        %v846 = vunpack.c.h.b16 %v792
        %v847 = vunpack.c.l.b16 %v793
        %v848 = vunpack.c.h.b16 %v793
        %v849 = vunpack.c.l.b16 %v794
        %v850 = vunpack.c.h.b16 %v794
        %v851 = vunpack.c.l.b16 %v795
        %v852 = vunpack.c.h.b16 %v795
        %v853 = vunpack.c.l.b16 %v796
        %v854 = vunpack.c.h.b16 %v796
        %v855 = vunpack.c.l.b16 %v797
        %v856 = vunpack.c.h.b16 %v797
        %v857 = vunpack.c.l.b16 %v798
        %v858 = vunpack.c.h.b16 %v798
        %v859 = vpack.c.b16 %v829, %v827
        %v860 = vpack.c.b16 %v830, %v828
        %v861 = vpack.c.b16 %v833, %v831
        %v862 = vpack.c.b16 %v834, %v832
        %v863 = vpack.c.b16 %v837, %v835
        %v864 = vpack.c.b16 %v838, %v836
        %v865 = vpack.c.b16 %v841, %v839
        %v866 = vpack.c.b16 %v842, %v840
        %v867 = vpack.c.b16 %v845, %v843
        %v868 = vpack.c.b16 %v846, %v844
        %v869 = vpack.c.b16 %v849, %v847
        %v870 = vpack.c.b16 %v850, %v848
        %v871 = vpack.c.b16 %v853, %v851
        %v872 = vpack.c.b16 %v854, %v852
        %v873 = vpack.c.b16 %v857, %v855
        %v874 = vpack.c.b16 %v858, %v856
        %891 = vmatprep.subr.bf16.mxu0 %v860
        %892 = vmatpush1.bf16.msra.mxu0 %v859
        %893 = vmatprep.subr.bf16.mxu0 %v862
        %894 = vmatpush1.bf16.msra.mxu0 %v861
        %895 = vmatprep.subr.bf16.mxu0 %v864
        %896 = vmatpush1.bf16.msra.mxu0 %v863
        %897 = vmatprep.subr.bf16.mxu0 %v866
        %898 = vmatpush1.bf16.msra.mxu0 %v865
        %899 = vmatprep.subr.bf16.mxu0 %v868
        %900 = vmatpush1.bf16.msra.mxu0 %v867
        %901 = vmatprep.subr.bf16.mxu0 %v870
        %902 = vmatpush1.bf16.msra.mxu0 %v869
        %903 = vmatprep.subr.bf16.mxu0 %v872
        %904 = vmatpush1.bf16.msra.mxu0 %v871
        %905 = vmatprep.subr.bf16.mxu0 %v874
        %906 = vmatpush1.bf16.msra.mxu0 %v873
        %907 = vmatprep.subr.bf16.mxu0 0
        %908 = vmatpush1.bf16.msra.mxu0 0
        %909 = vmatprep.subr.bf16.mxu0 0
        %910 = vmatpush1.bf16.msra.mxu0 0
        %911 = vmatprep.subr.bf16.mxu0 0
        %912 = vmatpush1.bf16.msra.mxu0 0
        %913 = vmatprep.subr.bf16.mxu0 0
        %914 = vmatpush1.bf16.msra.mxu0 0
        %915 = vmatprep.subr.bf16.mxu0 0
        %916 = vmatpush1.bf16.msra.mxu0 0
        %917 = vmatprep.subr.bf16.mxu0 0
        %918 = vmatpush1.bf16.msra.mxu0 0
        %919 = vmatprep.subr.bf16.mxu0 0
        %920 = vmatpush1.bf16.msra.mxu0 0
        %921 = vmatprep.subr.bf16.mxu0 0
        %922 = vmatpush1.bf16.msra.mxu0 0
        %923 = vmatprep.mubr.bf16.mxu0 0
        %924 = vmatmul.mubr.bf16.gmra.mrb[0].mxu0 %v767
        %v925 = vpop.f32.mrb[0].mxu0
        %v926 = vadd.f32 %v804, %v925
        %v927 = vpop.f32.mrb[0].mxu0
        %v928 = vadd.f32 %v808, %v927
        %v929 = vpop.f32.mrb[0].mxu0
        %v930 = vadd.f32 %v804, %v929
        %v931 = vpop.f32.mrb[0].mxu0
        %v932 = vadd.f32 %v808, %v931
        %933 = vmatprep.mubr.bf16.mxu0 0
        %934 = vmatmul.mubr.bf16.gmra.mrb[0].mxu0 %v768
        %v935 = vpop.f32.mrb[0].mxu0
        %v936 = vadd.f32 %v804, %v935
        %v937 = vpop.f32.mrb[0].mxu0
        %v938 = vadd.f32 %v808, %v937
        %v939 = vpop.f32.mrb[0].mxu0
        %v940 = vadd.f32 %v804, %v939
        %v941 = vpop.f32.mrb[0].mxu0
        %v942 = vadd.f32 %v808, %v941
        %943 = vmatprep.mubr.bf16.mxu0 0
        %944 = vmatmul.mubr.bf16.gmra.mrb[0].mxu0 %v769
        %v945 = vpop.f32.mrb[0].mxu0
        %v946 = vadd.f32 %v804, %v945
        %v947 = vpop.f32.mrb[0].mxu0
        %v948 = vadd.f32 %v808, %v947
        %v949 = vpop.f32.mrb[0].mxu0
        %v950 = vadd.f32 %v804, %v949
        %v951 = vpop.f32.mrb[0].mxu0
        %v952 = vadd.f32 %v808, %v951
        %953 = vmatprep.mubr.bf16.mxu0 0
        %954 = vmatmul.mubr.bf16.gmra.mrb[0].mxu0 %v770
        %v955 = vpop.f32.mrb[0].mxu0
        %v956 = vadd.f32 %v804, %v955
        %v957 = vpop.f32.mrb[0].mxu0
        %v958 = vadd.f32 %v808, %v957
        %v959 = vpop.f32.mrb[0].mxu0
        %v960 = vadd.f32 %v804, %v959
        %v961 = vpop.f32.mrb[0].mxu0
        %v962 = vadd.f32 %v808, %v961
        %963 = vmatprep.mubr.bf16.mxu0 0
        %964 = vmatmul.mubr.bf16.gmra.mrb[0].mxu0 %v771
        %v965 = vpop.f32.mrb[0].mxu0
        %v966 = vadd.f32 %v804, %v965
        %v967 = vpop.f32.mrb[0].mxu0
        %v968 = vadd.f32 %v808, %v967
        %v969 = vpop.f32.mrb[0].mxu0
        %v970 = vadd.f32 %v804, %v969
        %v971 = vpop.f32.mrb[0].mxu0
        %v972 = vadd.f32 %v808, %v971
        %973 = vmatprep.mubr.bf16.mxu0 0
        %974 = vmatmul.mubr.bf16.gmra.mrb[0].mxu0 %v772
        %v975 = vpop.f32.mrb[0].mxu0
        %v976 = vadd.f32 %v804, %v975
        %v977 = vpop.f32.mrb[0].mxu0
        %v978 = vadd.f32 %v808, %v977
        %v979 = vpop.f32.mrb[0].mxu0
        %v980 = vadd.f32 %v804, %v979
        %v981 = vpop.f32.mrb[0].mxu0
        %v982 = vadd.f32 %v808, %v981
        %983 = vmatprep.mubr.bf16.mxu0 0
        %984 = vmatmul.mubr.bf16.gmra.mrb[0].mxu0 %v773
        %v985 = vpop.f32.mrb[0].mxu0
        %v986 = vadd.f32 %v804, %v985
        %v987 = vpop.f32.mrb[0].mxu0
        %v988 = vadd.f32 %v808, %v987
        %v989 = vpop.f32.mrb[0].mxu0
        %v990 = vadd.f32 %v804, %v989
        %v991 = vpop.f32.mrb[0].mxu0
        %v992 = vadd.f32 %v808, %v991
        %993 = vmatprep.mubr.bf16.mxu0 0
        %994 = vmatmul.mubr.bf16.gmra.mrb[0].mxu0 %v774
        %v995 = vpop.f32.mrb[0].mxu0
        %v996 = vadd.f32 %v804, %v995
        %v997 = vpop.f32.mrb[0].mxu0
        %v998 = vadd.f32 %v808, %v997
        %v999 = vpop.f32.mrb[0].mxu0
        %v1000 = vadd.f32 %v804, %v999
        %v1001 = vpop.f32.mrb[0].mxu0
        %v1002 = vadd.f32 %v808, %v1001
        %1003 = vmatprep.mubr.bf16.mxu0 0
        %1004 = vmatmul.mubr.bf16.gmra.mrb[0].mxu0 %v775
        %v1005 = vpop.f32.mrb[0].mxu0
        %v1006 = vadd.f32 %v804, %v1005
        %v1007 = vpop.f32.mrb[0].mxu0
        %v1008 = vadd.f32 %v808, %v1007
        %v1009 = vpop.f32.mrb[0].mxu0
        %v1010 = vadd.f32 %v804, %v1009
        %v1011 = vpop.f32.mrb[0].mxu0
        %v1012 = vadd.f32 %v808, %v1011
        %1013 = vmatprep.mubr.bf16.mxu0 0
        %1014 = vmatmul.mubr.bf16.gmra.mrb[0].mxu0 %v776
        %v1015 = vpop.f32.mrb[0].mxu0
        %v1016 = vadd.f32 %v804, %v1015
        %v1017 = vpop.f32.mrb[0].mxu0
        %v1018 = vadd.f32 %v808, %v1017
        %v1019 = vpop.f32.mrb[0].mxu0
        %v1020 = vadd.f32 %v804, %v1019
        %v1021 = vpop.f32.mrb[0].mxu0
        %v1022 = vadd.f32 %v808, %v1021
        %1023 = vmatprep.mubr.bf16.mxu0 0
        %1024 = vmatmul.mubr.bf16.gmra.mrb[0].mxu0 %v777
        %v1025 = vpop.f32.mrb[0].mxu0
        %v1026 = vadd.f32 %v804, %v1025
        %v1027 = vpop.f32.mrb[0].mxu0
        %v1028 = vadd.f32 %v808, %v1027
        %v1029 = vpop.f32.mrb[0].mxu0
        %v1030 = vadd.f32 %v804, %v1029
        %v1031 = vpop.f32.mrb[0].mxu0
        %v1032 = vadd.f32 %v808, %v1031
        %1033 = vmatprep.mubr.bf16.mxu0 0
        %1034 = vmatmul.mubr.bf16.gmra.mrb[0].mxu0 %v778
        %v1035 = vpop.f32.mrb[0].mxu0
        %v1036 = vadd.f32 %v804, %v1035
        %v1037 = vpop.f32.mrb[0].mxu0
        %v1038 = vadd.f32 %v808, %v1037
        %v1039 = vpop.f32.mrb[0].mxu0
        %v1040 = vadd.f32 %v804, %v1039
        %v1041 = vpop.f32.mrb[0].mxu0
        %v1042 = vadd.f32 %v808, %v1041
        %1043 = vmatprep.mubr.bf16.mxu0 0
        %1044 = vmatmul.mubr.bf16.gmra.mrb[0].mxu0 %v779
        %v1045 = vpop.f32.mrb[0].mxu0
        %v1046 = vadd.f32 %v804, %v1045
        %v1047 = vpop.f32.mrb[0].mxu0
        %v1048 = vadd.f32 %v808, %v1047
        %v1049 = vpop.f32.mrb[0].mxu0
        %v1050 = vadd.f32 %v804, %v1049
        %v1051 = vpop.f32.mrb[0].mxu0
        %v1052 = vadd.f32 %v808, %v1051
        %1053 = vmatprep.mubr.bf16.mxu0 0
        %1054 = vmatmul.mubr.bf16.gmra.mrb[0].mxu0 %v780
        %v1055 = vpop.f32.mrb[0].mxu0
        %v1056 = vadd.f32 %v804, %v1055
        %v1057 = vpop.f32.mrb[0].mxu0
        %v1058 = vadd.f32 %v808, %v1057
        %v1059 = vpop.f32.mrb[0].mxu0
        %v1060 = vadd.f32 %v804, %v1059
        %v1061 = vpop.f32.mrb[0].mxu0
        %v1062 = vadd.f32 %v808, %v1061
        %1063 = vmatprep.mubr.bf16.mxu0 0
        %1064 = vmatmul.mubr.bf16.gmra.mrb[0].mxu0 %v781
        %v1065 = vpop.f32.mrb[0].mxu0
        %v1066 = vadd.f32 %v804, %v1065
        %v1067 = vpop.f32.mrb[0].mxu0
        %v1068 = vadd.f32 %v808, %v1067
        %v1069 = vpop.f32.mrb[0].mxu0
        %v1070 = vadd.f32 %v804, %v1069
        %v1071 = vpop.f32.mrb[0].mxu0
        %v1072 = vadd.f32 %v808, %v1071
        %1073 = vmatprep.mubr.bf16.mxu0 0
        %1074 = vmatmul.mubr.bf16.gmra.mrb[0].mxu0 %v782
        %v1075 = vpop.f32.mrb[0].mxu0
        %v1076 = vadd.f32 %v804, %v1075
        %v1077 = vpop.f32.mrb[0].mxu0
        %v1078 = vadd.f32 %v808, %v1077
        %v1079 = vpop.f32.mrb[0].mxu0
        %v1080 = vadd.f32 %v804, %v1079
        %v1081 = vpop.f32.mrb[0].mxu0
        %v1082 = vadd.f32 %v808, %v1081
        %1083 = vdwg.mxu0
        %v1084 = vmul.f32 %v926, 0.5
        %v1085 = vmul.f32 %v928, 0.5
        %v1086 = vmul.f32 %v930, 0.5
        %v1087 = vmul.f32 %v932, 0.5
        %v1088 = vmul.f32 %v936, 0.5
        %v1089 = vmul.f32 %v938, 0.5
        %v1090 = vmul.f32 %v940, 0.5
        %v1091 = vmul.f32 %v942, 0.5
        %v1092 = vmul.f32 %v946, 0.5
        %v1093 = vmul.f32 %v948, 0.5
        %v1094 = vmul.f32 %v950, 0.5
        %v1095 = vmul.f32 %v952, 0.5
        %v1096 = vmul.f32 %v956, 0.5
        %v1097 = vmul.f32 %v958, 0.5
        %v1098 = vmul.f32 %v960, 0.5
        %v1099 = vmul.f32 %v962, 0.5
        %v1100 = vmul.f32 %v966, 0.5
        %v1101 = vmul.f32 %v968, 0.5
        %v1102 = vmul.f32 %v970, 0.5
        %v1103 = vmul.f32 %v972, 0.5
        %v1104 = vmul.f32 %v976, 0.5
        %v1105 = vmul.f32 %v978, 0.5
        %v1106 = vmul.f32 %v980, 0.5
        %v1107 = vmul.f32 %v982, 0.5
        %v1108 = vmul.f32 %v986, 0.5
        %v1109 = vmul.f32 %v988, 0.5
        %v1110 = vmul.f32 %v990, 0.5
        %v1111 = vmul.f32 %v992, 0.5
        %v1112 = vmul.f32 %v996, 0.5
        %v1113 = vmul.f32 %v998, 0.5
        %v1114 = vmul.f32 %v1000, 0.5
        %v1115 = vmul.f32 %v1002, 0.5
        %v1116 = vmul.f32 %v1006, 0.5
        %v1117 = vmul.f32 %v1008, 0.5
        %v1118 = vmul.f32 %v1010, 0.5
        %v1119 = vmul.f32 %v1012, 0.5
        %v1120 = vmul.f32 %v1016, 0.5
        %v1121 = vmul.f32 %v1018, 0.5
        %v1122 = vmul.f32 %v1020, 0.5
        %v1123 = vmul.f32 %v1022, 0.5
        %v1124 = vmul.f32 %v1026, 0.5
        %v1125 = vmul.f32 %v1028, 0.5
        %v1126 = vmul.f32 %v1030, 0.5
        %v1127 = vmul.f32 %v1032, 0.5
        %v1128 = vmul.f32 %v1036, 0.5
        %v1129 = vmul.f32 %v1038, 0.5
        %v1130 = vmul.f32 %v1040, 0.5
        %v1131 = vmul.f32 %v1042, 0.5
        %v1132 = vmul.f32 %v1046, 0.5
        %v1133 = vmul.f32 %v1048, 0.5
        %v1134 = vmul.f32 %v1050, 0.5
        %v1135 = vmul.f32 %v1052, 0.5
        %v1136 = vmul.f32 %v1056, 0.5
        %v1137 = vmul.f32 %v1058, 0.5
        %v1138 = vmul.f32 %v1060, 0.5
        %v1139 = vmul.f32 %v1062, 0.5
        %v1140 = vmul.f32 %v1066, 0.5
        %v1141 = vmul.f32 %v1068, 0.5
        %v1142 = vmul.f32 %v1070, 0.5
        %v1143 = vmul.f32 %v1072, 0.5
        %v1144 = vmul.f32 %v1076, 0.5
        %v1145 = vmul.f32 %v1078, 0.5
        %v1146 = vmul.f32 %v1080, 0.5
        %v1147 = vmul.f32 %v1082, 0.5
        %v1148 = vtanh.pop %v1084
        %v1149 = vtanh.pop %v1085
        %v1150 = vtanh.pop %v1086
        %v1151 = vtanh.pop %v1087
        %v1152 = vtanh.pop %v1088
        %v1153 = vtanh.pop %v1089
        %v1154 = vtanh.pop %v1090
        %v1155 = vtanh.pop %v1091
        %v1156 = vtanh.pop %v1092
        %v1157 = vtanh.pop %v1093
        %v1158 = vtanh.pop %v1094
        %v1159 = vtanh.pop %v1095
        %v1160 = vtanh.pop %v1096
        %v1161 = vtanh.pop %v1097
        %v1162 = vtanh.pop %v1098
        %v1163 = vtanh.pop %v1099
        %v1164 = vtanh.pop %v1100
        %v1165 = vtanh.pop %v1101
        %v1166 = vtanh.pop %v1102
        %v1167 = vtanh.pop %v1103
        %v1168 = vtanh.pop %v1104
        %v1169 = vtanh.pop %v1105
        %v1170 = vtanh.pop %v1106
        %v1171 = vtanh.pop %v1107
        %v1172 = vtanh.pop %v1108
        %v1173 = vtanh.pop %v1109
        %v1174 = vtanh.pop %v1110
        %v1175 = vtanh.pop %v1111
        %v1176 = vtanh.pop %v1112
        %v1177 = vtanh.pop %v1113
        %v1178 = vtanh.pop %v1114
        %v1179 = vtanh.pop %v1115
        %v1180 = vtanh.pop %v1116
        %v1181 = vtanh.pop %v1117
        %v1182 = vtanh.pop %v1118
        %v1183 = vtanh.pop %v1119
        %v1184 = vtanh.pop %v1120
        %v1185 = vtanh.pop %v1121
        %v1186 = vtanh.pop %v1122
        %v1187 = vtanh.pop %v1123
        %v1188 = vtanh.pop %v1124
        %v1189 = vtanh.pop %v1125
        %v1190 = vtanh.pop %v1126
        %v1191 = vtanh.pop %v1127
        %v1192 = vtanh.pop %v1128
        %v1193 = vtanh.pop %v1129
        %v1194 = vtanh.pop %v1130
        %v1195 = vtanh.pop %v1131
        %v1196 = vtanh.pop %v1132
        %v1197 = vtanh.pop %v1133
        %v1198 = vtanh.pop %v1134
        %v1199 = vtanh.pop %v1135
        %v1200 = vtanh.pop %v1136
        %v1201 = vtanh.pop %v1137
        %v1202 = vtanh.pop %v1138
        %v1203 = vtanh.pop %v1139
        %v1204 = vtanh.pop %v1140
        %v1205 = vtanh.pop %v1141
        %v1206 = vtanh.pop %v1142
        %v1207 = vtanh.pop %v1143
        %v1208 = vtanh.pop %v1144
        %v1209 = vtanh.pop %v1145
        %v1210 = vtanh.pop %v1146
        %v1211 = vtanh.pop %v1147
        %v1212 = vadd.f32 %v1148, 1.0
        %v1213 = vadd.f32 %v1149, 1.0
        %v1214 = vadd.f32 %v1150, 1.0
        %v1215 = vadd.f32 %v1151, 1.0
        %v1216 = vadd.f32 %v1152, 1.0
        %v1217 = vadd.f32 %v1153, 1.0
        %v1218 = vadd.f32 %v1154, 1.0
        %v1219 = vadd.f32 %v1155, 1.0
        %v1220 = vadd.f32 %v1156, 1.0
        %v1221 = vadd.f32 %v1157, 1.0
        %v1222 = vadd.f32 %v1158, 1.0
        %v1223 = vadd.f32 %v1159, 1.0
        %v1224 = vadd.f32 %v1160, 1.0
        %v1225 = vadd.f32 %v1161, 1.0
        %v1226 = vadd.f32 %v1162, 1.0
        %v1227 = vadd.f32 %v1163, 1.0
        %v1228 = vadd.f32 %v1164, 1.0
        %v1229 = vadd.f32 %v1165, 1.0
        %v1230 = vadd.f32 %v1166, 1.0
        %v1231 = vadd.f32 %v1167, 1.0
        %v1232 = vadd.f32 %v1168, 1.0
        %v1233 = vadd.f32 %v1169, 1.0
        %v1234 = vadd.f32 %v1170, 1.0
        %v1235 = vadd.f32 %v1171, 1.0
        %v1236 = vadd.f32 %v1172, 1.0
        %v1237 = vadd.f32 %v1173, 1.0
        %v1238 = vadd.f32 %v1174, 1.0
        %v1239 = vadd.f32 %v1175, 1.0
        %v1240 = vadd.f32 %v1176, 1.0
        %v1241 = vadd.f32 %v1177, 1.0
        %v1242 = vadd.f32 %v1178, 1.0
        %v1243 = vadd.f32 %v1179, 1.0
        %v1244 = vadd.f32 %v1180, 1.0
        %v1245 = vadd.f32 %v1181, 1.0
        %v1246 = vadd.f32 %v1182, 1.0
        %v1247 = vadd.f32 %v1183, 1.0
        %v1248 = vadd.f32 %v1184, 1.0
        %v1249 = vadd.f32 %v1185, 1.0
        %v1250 = vadd.f32 %v1186, 1.0
        %v1251 = vadd.f32 %v1187, 1.0
        %v1252 = vadd.f32 %v1188, 1.0
        %v1253 = vadd.f32 %v1189, 1.0
        %v1254 = vadd.f32 %v1190, 1.0
        %v1255 = vadd.f32 %v1191, 1.0
        %v1256 = vadd.f32 %v1192, 1.0
        %v1257 = vadd.f32 %v1193, 1.0
        %v1258 = vadd.f32 %v1194, 1.0
        %v1259 = vadd.f32 %v1195, 1.0
        %v1260 = vadd.f32 %v1196, 1.0
        %v1261 = vadd.f32 %v1197, 1.0
        %v1262 = vadd.f32 %v1198, 1.0
        %v1263 = vadd.f32 %v1199, 1.0
        %v1264 = vadd.f32 %v1200, 1.0
        %v1265 = vadd.f32 %v1201, 1.0
        %v1266 = vadd.f32 %v1202, 1.0
        %v1267 = vadd.f32 %v1203, 1.0
        %v1268 = vadd.f32 %v1204, 1.0
        %v1269 = vadd.f32 %v1205, 1.0
        %v1270 = vadd.f32 %v1206, 1.0
        %v1271 = vadd.f32 %v1207, 1.0
        %v1272 = vadd.f32 %v1208, 1.0
        %v1273 = vadd.f32 %v1209, 1.0
        %v1274 = vadd.f32 %v1210, 1.0
        %v1275 = vadd.f32 %v1211, 1.0
        %v1276 = vmul.f32 %v1212, 0.5
        %v1277 = vmul.f32 %v1213, 0.5
        %v1278 = vmul.f32 %v1214, 0.5
        %v1279 = vmul.f32 %v1215, 0.5
        %v1280 = vmul.f32 %v1216, 0.5
        %v1281 = vmul.f32 %v1217, 0.5
        %v1282 = vmul.f32 %v1218, 0.5
        %v1283 = vmul.f32 %v1219, 0.5
        %v1284 = vmul.f32 %v1220, 0.5
        %v1285 = vmul.f32 %v1221, 0.5
        %v1286 = vmul.f32 %v1222, 0.5
        %v1287 = vmul.f32 %v1223, 0.5
        %v1288 = vmul.f32 %v1224, 0.5
        %v1289 = vmul.f32 %v1225, 0.5
        %v1290 = vmul.f32 %v1226, 0.5
        %v1291 = vmul.f32 %v1227, 0.5
        %v1292 = vmul.f32 %v1228, 0.5
        %v1293 = vmul.f32 %v1229, 0.5
        %v1294 = vmul.f32 %v1230, 0.5
        %v1295 = vmul.f32 %v1231, 0.5
        %v1296 = vmul.f32 %v1232, 0.5
        %v1297 = vmul.f32 %v1233, 0.5
        %v1298 = vmul.f32 %v1234, 0.5
        %v1299 = vmul.f32 %v1235, 0.5
        %v1300 = vmul.f32 %v1236, 0.5
        %v1301 = vmul.f32 %v1237, 0.5
        %v1302 = vmul.f32 %v1238, 0.5
        %v1303 = vmul.f32 %v1239, 0.5
        %v1304 = vmul.f32 %v1240, 0.5
        %v1305 = vmul.f32 %v1241, 0.5
        %v1306 = vmul.f32 %v1242, 0.5
        %v1307 = vmul.f32 %v1243, 0.5
        %v1308 = vmul.f32 %v1244, 0.5
        %v1309 = vmul.f32 %v1245, 0.5
        %v1310 = vmul.f32 %v1246, 0.5
        %v1311 = vmul.f32 %v1247, 0.5
        %v1312 = vmul.f32 %v1248, 0.5
        %v1313 = vmul.f32 %v1249, 0.5
        %v1314 = vmul.f32 %v1250, 0.5
        %v1315 = vmul.f32 %v1251, 0.5
        %v1316 = vmul.f32 %v1252, 0.5
        %v1317 = vmul.f32 %v1253, 0.5
        %v1318 = vmul.f32 %v1254, 0.5
        %v1319 = vmul.f32 %v1255, 0.5
        %v1320 = vmul.f32 %v1256, 0.5
        %v1321 = vmul.f32 %v1257, 0.5
        %v1322 = vmul.f32 %v1258, 0.5
        %v1323 = vmul.f32 %v1259, 0.5
        %v1324 = vmul.f32 %v1260, 0.5
        %v1325 = vmul.f32 %v1261, 0.5
        %v1326 = vmul.f32 %v1262, 0.5
        %v1327 = vmul.f32 %v1263, 0.5
        %v1328 = vmul.f32 %v1264, 0.5
        %v1329 = vmul.f32 %v1265, 0.5
        %v1330 = vmul.f32 %v1266, 0.5
        %v1331 = vmul.f32 %v1267, 0.5
        %v1332 = vmul.f32 %v1268, 0.5
        %v1333 = vmul.f32 %v1269, 0.5
        %v1334 = vmul.f32 %v1270, 0.5
        %v1335 = vmul.f32 %v1271, 0.5
        %v1336 = vmul.f32 %v1272, 0.5
        %v1337 = vmul.f32 %v1273, 0.5
        %v1338 = vmul.f32 %v1274, 0.5
        %v1339 = vmul.f32 %v1275, 0.5
        %1340 = vst [vmem:[%s243] sm:$0xff] %v1276
        %1341 = vst [vmem:[%s243 + $0x8] sm:$0xff] %v1277
        %1342 = vst [vmem:[%s243 + $0x10] sm:$0xff] %v1278
        %1343 = vst [vmem:[%s243 + $0x18] sm:$0xff] %v1279
        %1344 = vst [vmem:[%s243 + $0x20] sm:$0xff] %v1280
        %1345 = vst [vmem:[%s243 + $0x28] sm:$0xff] %v1281
        %1346 = vst [vmem:[%s243 + $0x30] sm:$0xff] %v1282
        %1347 = vst [vmem:[%s243 + $0x38] sm:$0xff] %v1283
        %1348 = vst [vmem:[%s243 + $0x40] sm:$0xff] %v1284
        %1349 = vst [vmem:[%s243 + $0x48] sm:$0xff] %v1285
        %1350 = vst [vmem:[%s243 + $0x50] sm:$0xff] %v1286
        %1351 = vst [vmem:[%s243 + $0x58] sm:$0xff] %v1287
        %1352 = vst [vmem:[%s243 + $0x60] sm:$0xff] %v1288
        %1353 = vst [vmem:[%s243 + $0x68] sm:$0xff] %v1289
        %1354 = vst [vmem:[%s243 + $0x70] sm:$0xff] %v1290
        %1355 = vst [vmem:[%s243 + $0x78] sm:$0xff] %v1291
        %1356 = vst [vmem:[%s243 + $0x80] sm:$0xff] %v1292
        %1357 = vst [vmem:[%s243 + $0x88] sm:$0xff] %v1293
        %1358 = vst [vmem:[%s243 + $0x90] sm:$0xff] %v1294
        %1359 = vst [vmem:[%s243 + $0x98] sm:$0xff] %v1295
        %1360 = vst [vmem:[%s243 + $0xa0] sm:$0xff] %v1296
        %1361 = vst [vmem:[%s243 + $0xa8] sm:$0xff] %v1297
        %1362 = vst [vmem:[%s243 + $0xb0] sm:$0xff] %v1298
        %1363 = vst [vmem:[%s243 + $0xb8] sm:$0xff] %v1299
        %1364 = vst [vmem:[%s243 + $0xc0] sm:$0xff] %v1300
        %1365 = vst [vmem:[%s243 + $0xc8] sm:$0xff] %v1301
        %1366 = vst [vmem:[%s243 + $0xd0] sm:$0xff] %v1302
        %1367 = vst [vmem:[%s243 + $0xd8] sm:$0xff] %v1303
        %1368 = vst [vmem:[%s243 + $0xe0] sm:$0xff] %v1304
        %1369 = vst [vmem:[%s243 + $0xe8] sm:$0xff] %v1305
        %1370 = vst [vmem:[%s243 + $0xf0] sm:$0xff] %v1306
        %1371 = vst [vmem:[%s243 + $0xf8] sm:$0xff] %v1307
        %1372 = vst [vmem:[%s243 + $0x100] sm:$0xff] %v1308
        %1373 = vst [vmem:[%s243 + $0x108] sm:$0xff] %v1309
        %1374 = vst [vmem:[%s243 + $0x110] sm:$0xff] %v1310
        %1375 = vst [vmem:[%s243 + $0x118] sm:$0xff] %v1311
        %1376 = vst [vmem:[%s243 + $0x120] sm:$0xff] %v1312
        %1377 = vst [vmem:[%s243 + $0x128] sm:$0xff] %v1313
        %1378 = vst [vmem:[%s243 + $0x130] sm:$0xff] %v1314
        %1379 = vst [vmem:[%s243 + $0x138] sm:$0xff] %v1315
        %1380 = vst [vmem:[%s243 + $0x140] sm:$0xff] %v1316
        %1381 = vst [vmem:[%s243 + $0x148] sm:$0xff] %v1317
        %1382 = vst [vmem:[%s243 + $0x150] sm:$0xff] %v1318
        %1383 = vst [vmem:[%s243 + $0x158] sm:$0xff] %v1319
        %1384 = vst [vmem:[%s243 + $0x160] sm:$0xff] %v1320
        %1385 = vst [vmem:[%s243 + $0x168] sm:$0xff] %v1321
        %1386 = vst [vmem:[%s243 + $0x170] sm:$0xff] %v1322
        %1387 = vst [vmem:[%s243 + $0x178] sm:$0xff] %v1323
        %1388 = vst [vmem:[%s243 + $0x180] sm:$0xff] %v1324
        %1389 = vst [vmem:[%s243 + $0x188] sm:$0xff] %v1325
        %1390 = vst [vmem:[%s243 + $0x190] sm:$0xff] %v1326
        %1391 = vst [vmem:[%s243 + $0x198] sm:$0xff] %v1327
        %1392 = vst [vmem:[%s243 + $0x1a0] sm:$0xff] %v1328
        %1393 = vst [vmem:[%s243 + $0x1a8] sm:$0xff] %v1329
        %1394 = vst [vmem:[%s243 + $0x1b0] sm:$0xff] %v1330
        %1395 = vst [vmem:[%s243 + $0x1b8] sm:$0xff] %v1331
        %1396 = vst [vmem:[%s243 + $0x1c0] sm:$0xff] %v1332
        %1397 = vst [vmem:[%s243 + $0x1c8] sm:$0xff] %v1333
        %1398 = vst [vmem:[%s243 + $0x1d0] sm:$0xff] %v1334
        %1399 = vst [vmem:[%s243 + $0x1d8] sm:$0xff] %v1335
        %1400 = vst [vmem:[%s243 + $0x1e0] sm:$0xff] %v1336
        %1401 = vst [vmem:[%s243 + $0x1e8] sm:$0xff] %v1337
        %1402 = vst [vmem:[%s243 + $0x1f0] sm:$0xff] %v1338
        %1403 = vst [vmem:[%s243 + $0x1f8] sm:$0xff] %v1339
        %s1404 = sand.u32 %s140, 1
        %s1405 = scalar_lea.sflag [#allocation4], %s1404
        %s1406 = sand.u32 %s140, 1
        %s1407 = smul.addr %s1406, 512
        %s1408 = scalar_lea.vmem [#allocation5], %s1407
        // Predicated region
        $region45: #{autoencoder_forward.1} parent=39 // pred_check
          %p1409 = pneg %p150
        $region46: #{autoencoder_forward.1} parent=39 // pred_check_branch
          %1411 = sbr.rel (%p1409) target = $region48
        $region47: #{autoencoder_forward.1} parent=39 // pred_region
          %s1412 = smul.u32 32, %s22
          %s1414 = ssub.s32 8192, 8192
          %1415 = vsyncadd %s1405, %s1414
          %s1416 = smul.addr %s1412, 2
          %s1417 = smul.addr %s1416, 128
          %s1418 = scalar_lea.hbm %s5, %s1417
          %s1419 = sshll.u32 %s1408, 4
          %s1420 = int_to_ptr.vmem [resolvable:$true] %s1419
          %1425 = dma.vmem_to_hbm [thread:$0]  %s1420, 8192, %s1418, %s1405, 256, 256, 16
        $region48: #{autoencoder_forward.1} parent=39 // pred_fallthru
          _
      $region40: #{autoencoder_forward.1} parent=5 // pred_fallthru
        _
      %p1426 = scmp.le.s32.totalorder 2, %s17
      // Predicated region
      $region49: #{autoencoder_forward.1} parent=5 // pred_check
        %p1427 = pneg %p1426
      $region50: #{autoencoder_forward.1} parent=5 // pred_check_branch
        %1429 = sbr.rel (%p1427) target = $region52
      $region51: #{autoencoder_forward.1} parent=5 // pred_region
        %s1430 = ssub.s32 %s17, 2
        // Predicated region
        $region53: #{autoencoder_forward.1} parent=51 // pred_check
          %p1431 = pneg %p156
        $region54: #{autoencoder_forward.1} parent=51 // pred_check_branch
          %1433 = sbr.rel (%p1431) target = $region56
        $region55: #{autoencoder_forward.1} parent=51 // pred_region
          %s1434 = sand.u32 %s141, 1
          %s1435 = scalar_lea.sflag [#allocation4], %s1434
          %s1436 = sand.u32 %s141, 1
          %s1437 = smul.addr %s1436, 512
          %s1438 = scalar_lea.vmem [#allocation5], %s1437
          %1439 = dma.done %s1435, 8192
        $region56: #{autoencoder_forward.1} parent=51 // pred_fallthru
          _
      $region52: #{autoencoder_forward.1} parent=5 // pred_fallthru
        _
    $region6: #{autoencoder_forward.1} parent=1 // loop_footer
      %s21 = sadd.s32 1, %s17
    $region7: #{autoencoder_forward.1} parent=1 // loop_footer_branch
      %16 = sbr.rel target = $region3
    $region8: #{autoencoder_forward.1} parent=1 // loop_exit
      _
    %1440 = vsyncpa [#allocation3], 1
    %s1441 = scalar_lea.sflag [#allocation3], 1
    %1442 = vsyncpa %s1441, 1
    %1443 = vsyncpa [#allocation4], 1
    %s1444 = scalar_lea.sflag [#allocation4], 1
    %1445 = vsyncpa %s1444, 1

</llo_original>
